<compile_context>
chip_gen: v5e
topology: v5e:2x2
jax: 0.10.0
libtpu: 0.0.40
codegen_flags: <defaults>
</compile_context>

<pallas_src>
import functools
import math

import jax
import jax.numpy as jnp
from jax import lax
from jax.experimental import pallas as pl
from jax.experimental.pallas import tpu as pltpu

_NEG_BIG = -1e30     # finite "-inf" used to mask diagonal / padded columns
_MAX_FLOOR = -1e29   # running-max floor: keeps exp(_NEG_BIG - m) == 0 even if
                     # an entire streamed column tile is masked
_NORM_EPS = 1e-16    # squared-norm clamp ~ x / max(||x||, 1e-8)


def _round_up(x, m):
    return ((x + m - 1) // m) * m


# --------------------------------------------------------------------------
# Kernels
# --------------------------------------------------------------------------
def _lse_resident_kernel(rows_ref, cols_ref, out_ref, *, row_tile, n_valid):
    """Column operand (whole normalized reps slab) is VMEM-resident.

    Grid = (num_row_tiles,).  Emits per-row logsumexp over all columns != row.
    """
    i = pl.program_id(0)
    # logits tile = rows . cols^T (1/T already folded in the wrapper);
    # contraction on the feature axis — no transposed operand copy.
    s = lax.dot_general(
        rows_ref[...], cols_ref[...],
        dimension_numbers=(((1,), (1,)), ((), ())),
        preferred_element_type=jnp.float32)            # [row_tile, n_pad] f32

    n_pad = s.shape[-1]
    row_ids = i * row_tile + lax.broadcasted_iota(jnp.int32, (row_tile, 1), 0)
    col_ids = lax.broadcasted_iota(jnp.int32, (1, n_pad), 1)
    neg = jnp.float32(_NEG_BIG)
    s = jnp.where(row_ids == col_ids, neg, s)          # mask self-similarity
    if n_pad > n_valid:                                # static: mask padding
        s = jnp.where(col_ids >= n_valid, neg, s)

    m = jnp.max(s, axis=-1, keepdims=True)
    l = jnp.sum(jnp.exp(s - m), axis=-1, keepdims=True)
    out_ref[...] = m + jnp.log(l)                      # [row_tile, 1]


def _lse_stream_kernel(rows_ref, cols_ref, out_ref, m_sc, l_sc, *,
                       row_tile, col_tile, n_valid, n_pad):
    """Flash-style online logsumexp over streamed column tiles.

    Grid = (num_row_tiles, num_col_tiles); the col axis is the reduction.
    """
    i = pl.program_id(0)
    j = pl.program_id(1)

    @pl.when(j == 0)
    def _init():
        m_sc[...] = jnp.full(m_sc.shape, -jnp.inf, dtype=jnp.float32)
        l_sc[...] = jnp.zeros(l_sc.shape, dtype=jnp.float32)

    s = lax.dot_general(
        rows_ref[...], cols_ref[...],
        dimension_numbers=(((1,), (1,)), ((), ())),
        preferred_element_type=jnp.float32)            # [row_tile, col_tile]

    row_ids = i * row_tile + lax.broadcasted_iota(jnp.int32, (row_tile, 1), 0)
    col_ids = j * col_tile + lax.broadcasted_iota(jnp.int32, (1, col_tile), 1)
    neg = jnp.float32(_NEG_BIG)
    s = jnp.where(row_ids == col_ids, neg, s)
    if n_pad > n_valid:                                # static: mask padding
        s = jnp.where(col_ids >= n_valid, neg, s)

    # Online LSE.  The _MAX_FLOOR clamp guarantees fully-masked tiles
    # contribute exactly zero (exp(-1e30 - m) underflows to 0).
    m_prev = m_sc[...]
    tile_max = jnp.maximum(jnp.max(s, axis=-1, keepdims=True),
                           jnp.float32(_MAX_FLOOR))
    m_new = jnp.maximum(m_prev, tile_max)
    l_sc[...] = (jnp.exp(m_prev - m_new) * l_sc[...]
                 + jnp.sum(jnp.exp(s - m_new), axis=-1, keepdims=True))
    m_sc[...] = m_new

    @pl.when(j == pl.num_programs(1) - 1)
    def _finalize():
        out_ref[...] = m_sc[...] + jnp.log(l_sc[...])  # [row_tile, 1]


# --------------------------------------------------------------------------
# Tile / VMEM budgeting helpers
# --------------------------------------------------------------------------
def _vmem_capacity_bytes():
    try:
        cap = int(pltpu.get_tpu_info().vmem_capacity_bytes)
        if cap > 0:
            return cap
    except Exception:
        pass
    return 64 * 1024 * 1024   # conservative default (v7x per-TensorCore)


def _choose_row_tile(n, d, itemsize, budget):
    # Multiples of 8, MXU-friendly sizes, >=2 row tiles when possible (so the
    # "parallel" axis splits across v7x's two TensorCores), bounded padding.
    for c in (512, 256, 128, 64, 32, 16, 8):
        n_pad = _round_up(n, c)
        if c != 8:
            if n_pad // c < 2:
                continue                     # want >= 2 row tiles
            if n_pad - n >= c:
                continue                     # avoid a full tile of padding
        if 2 * c * d * itemsize > max(budget // 4, 1):
            continue                         # rows double-buffer too large
        return c
    return 8


def _choose_col_tile(n_pad, d, itemsize, row_tile, budget):
    for c in (512, 256, 128, 64, 32, 16, 8):
        if c > n_pad:
            continue
        need = (2 * row_tile * d * itemsize + 2 * c * d * itemsize
                + 4 * row_tile * c * 4)
        if need <= budget:
            return c
    return 8


def _resident_need_bytes(n_pad, d, itemsize, row_tile):
    return (2 * n_pad * d * itemsize          # resident column slab (x2 safety)
            + 2 * row_tile * d * itemsize     # row-tile double buffer
            + 4 * row_tile * n_pad * 4        # f32 logits + exp/mask temporaries
            + 2 * row_tile * 4)               # output tile


# --------------------------------------------------------------------------
# Public wrapper
# --------------------------------------------------------------------------
def ntxent_loss(zi, zj, *, temperature=0.5, use_cosine_similarity=True,
                mxu_dtype=jnp.bfloat16, row_tile=None, col_tile=None,
                force_streaming=False):
    """NT-Xent loss.  zi, zj: [batch, dim] embeddings of the two views."""
    assert zi.shape == zj.shape and zi.ndim == 2
    b, d = zi.shape
    n = 2 * b
    inv_t = 1.0 / float(temperature)

    # ---- One O(n*D) wrapper pass: normalize + fold sqrt(1/T) into the single
    # array that serves as BOTH matmul operands (so MXU output is sim / T). ----
    reps = jnp.concatenate([zj, zi], axis=0).astype(jnp.float32)       # [2B, D]
    if use_cosine_similarity:
        sumsq = jnp.sum(reps * reps, axis=-1, keepdims=True)
        reps = reps * lax.rsqrt(jnp.maximum(sumsq, jnp.float32(_NORM_EPS)))
    scaled = reps * jnp.float32(math.sqrt(inv_t))
    # Positive logit per row: partner of row r is row (r + B) mod 2B.
    pos = jnp.sum(scaled * jnp.roll(scaled, -b, axis=0), axis=-1)      # [2B] f32

    operand = scaled.astype(mxu_dtype)
    itemsize = jnp.dtype(mxu_dtype).itemsize
    capacity = _vmem_capacity_bytes()
    budget = int(0.7 * capacity)

    if row_tile is None:
        row_tile = _choose_row_tile(n, d, itemsize, budget)
    assert row_tile % 8 == 0, "row_tile must be a multiple of 8"
    n_pad = _round_up(n, row_tile)

    resident = ((not force_streaming) and (col_tile is None)
                and _resident_need_bytes(n_pad, d, itemsize, row_tile) <= budget)
    if not resident:
        if col_tile is None:
            col_tile = _choose_col_tile(n_pad, d, itemsize, row_tile, budget)
        assert col_tile % 8 == 0, "col_tile must be a multiple of 8"
        n_pad = _round_up(n, math.lcm(row_tile, col_tile))

    if n_pad > n:                              # pad with masked (zero) rows
        operand = jnp.pad(operand, ((0, n_pad - n), (0, 0)))
    num_row_tiles = n_pad // row_tile
    flops = 2 * n_pad * n_pad * d

    if resident:
        need = _resident_need_bytes(n_pad, d, itemsize, row_tile)
        vmem_limit = int(min(capacity, max(2 * need, 32 * 1024 * 1024)))
        cost = pl.CostEstimate(
            flops=flops, transcendentals=n_pad * n_pad,
            bytes_accessed=2 * n_pad * d * itemsize + n_pad * 4)
        lse = pl.pallas_call(
            functools.partial(_lse_resident_kernel,
                              row_tile=row_tile, n_valid=n),
            out_shape=jax.ShapeDtypeStruct((n_pad, 1), jnp.float32),
            grid_spec=pltpu.PrefetchScalarGridSpec(
                num_scalar_prefetch=0,
                grid=(num_row_tiles,),
                in_specs=[
                    pl.BlockSpec((row_tile, d), lambda i: (i, 0)),   # row tiles
                    pl.BlockSpec((n_pad, d), lambda i: (0, 0)),      # resident cols
                ],
                out_specs=pl.BlockSpec((row_tile, 1), lambda i: (i, 0)),
            ),
            compiler_params=pltpu.CompilerParams(
                dimension_semantics=("parallel",),
                vmem_limit_bytes=vmem_limit),
            cost_estimate=cost,
        )(operand, operand)
    else:
        num_col_tiles = n_pad // col_tile
        need = (2 * row_tile * d * itemsize + 2 * col_tile * d * itemsize
                + 4 * row_tile * col_tile * 4 + 2 * row_tile * 4)
        vmem_limit = int(min(capacity, max(2 * need, 32 * 1024 * 1024)))
        cost = pl.CostEstimate(
            flops=flops, transcendentals=n_pad * n_pad,
            bytes_accessed=(num_row_tiles * n_pad * d * itemsize
                            + n_pad * d * itemsize + n_pad * 4))
        lse = pl.pallas_call(
            functools.partial(_lse_stream_kernel, row_tile=row_tile,
                              col_tile=col_tile, n_valid=n, n_pad=n_pad),
            out_shape=jax.ShapeDtypeStruct((n_pad, 1), jnp.float32),
            grid_spec=pltpu.PrefetchScalarGridSpec(
                num_scalar_prefetch=0,
                grid=(num_row_tiles, num_col_tiles),
                in_specs=[
                    pl.BlockSpec((row_tile, d), lambda i, j: (i, 0)),
                    pl.BlockSpec((col_tile, d), lambda i, j: (j, 0)),
                ],
                out_specs=pl.BlockSpec((row_tile, 1), lambda i, j: (i, 0)),
                scratch_shapes=[
                    pltpu.VMEM((row_tile, 1), jnp.float32),   # running max
                    pltpu.VMEM((row_tile, 1), jnp.float32),   # running sum(exp)
                ],
            ),
            compiler_params=pltpu.CompilerParams(
                dimension_semantics=("parallel", "arbitrary"),
                vmem_limit_bytes=vmem_limit),
            cost_estimate=cost,
        )(operand, operand)

    lse = lse.reshape(-1)[:n]                  # drop padded rows
    return jnp.sum(lse - pos) / jnp.float32(n)


# --------------------------------------------------------------------------
# Pure-JAX reference mirroring the PyTorch module
# --------------------------------------------------------------------------
def _ntxent_reference(zi, zj, temperature, use_cosine):
    reps = jnp.concatenate([zj, zi], axis=0).astype(jnp.float32)
    n = reps.shape[0]
    b = n // 2
    gram = reps @ reps.T
    if use_cosine:
        norms = jnp.sqrt(jnp.sum(reps * reps, axis=-1, keepdims=True))
        sim = gram / jnp.maximum(norms * norms.T, 1e-8)
    else:
        sim = gram
    logits = sim / temperature
    idx = jnp.arange(n)
    pos = logits[idx, (idx + b) % n]
    masked = jnp.where(jnp.eye(n, dtype=bool), -jnp.inf, logits)
    lse = jax.scipy.special.logsumexp(masked, axis=-1)
    return jnp.sum(lse - pos) / n


if __name__ == "__main__":
    key = jax.random.PRNGKey(0)
    k1, k2, k3, k4, k5, k6 = jax.random.split(key, 6)

    # Small shapes consistent with the module: batch=4, embedding_dim=32.
    zi = jax.random.normal(k1, (4, 32), dtype=jnp.float32)
    zj = jax.random.normal(k2, (4, 32), dtype=jnp.float32)

    # 1) f32 MXU operands — tight check vs the pure-JAX reference (cosine).
    loss_f32 = jax.block_until_ready(
        ntxent_loss(zi, zj, temperature=0.5, use_cosine_similarity=True,
                    mxu_dtype=jnp.float32))
    ref = _ntxent_reference(zi, zj, 0.5, True)
    assert jnp.allclose(loss_f32, ref, rtol=1e-4, atol=1e-4), (loss_f32, ref)

    # 2) Default path: bf16 MXU operands (f32 accumulation) — looser tolerance.
    loss_bf16 = jax.block_until_ready(
        ntxent_loss(zi, zj, temperature=0.5, use_cosine_similarity=True))
    assert jnp.allclose(loss_bf16, ref, rtol=3e-2, atol=3e-2), (loss_bf16, ref)

    # 3) Dot-product similarity path.
    loss_dot = jax.block_until_ready(
        ntxent_loss(zi, zj, temperature=0.5, use_cosine_similarity=False,
                    mxu_dtype=jnp.float32))
    ref_dot = _ntxent_reference(zi, zj, 0.5, False)
    assert jnp.allclose(loss_dot, ref_dot, rtol=1e-3, atol=1e-3), (loss_dot, ref_dot)

    # 4) Odd batch -> padded rows/columns exercise the padding mask.
    zi_odd = jax.random.normal(k3, (5, 32), dtype=jnp.float32)
    zj_odd = jax.random.normal(k4, (5, 32), dtype=jnp.float32)
    loss_odd = jax.block_until_ready(
        ntxent_loss(zi_odd, zj_odd, temperature=0.5, use_cosine_similarity=True,
                    mxu_dtype=jnp.float32))
    ref_odd = _ntxent_reference(zi_odd, zj_odd, 0.5, True)
    assert jnp.allclose(loss_odd, ref_odd, rtol=1e-4, atol=1e-4), (loss_odd, ref_odd)

    # 5) Force the streaming (flash-style online-LSE) multi-col-tile path.
    zi_big = jax.random.normal(k5, (32, 64), dtype=jnp.float32)
    zj_big = jax.random.normal(k6, (32, 64), dtype=jnp.float32)
    loss_big = jax.block_until_ready(
        ntxent_loss(zi_big, zj_big, temperature=0.5, use_cosine_similarity=True,
                    row_tile=16, col_tile=32, force_streaming=True))
    ref_big = _ntxent_reference(zi_big, zj_big, 0.5, True)
    assert jnp.allclose(loss_big, ref_big, rtol=3e-2, atol=3e-2), (loss_big, ref_big)

    print("KERNEL_OK")
</pallas_src>

<mosaic_0001>
module attributes {stable_mosaic.version = 11 : i64} {
  func.func @_lse_resident_kernel(%arg0: i32, %arg1: memref<8x32xf32, #tpu.memory_space<vmem>>, %arg2: memref<8x32xf32, #tpu.memory_space<vmem>>, %arg3: memref<8x1xf32, #tpu.memory_space<vmem>>) attributes {dimension_semantics = [#tpu.dimension_semantics<parallel>], iteration_bounds = array<i64: 1>, scalar_prefetch = 0 : i64, scratch_operands = 0 : i64, tpu.core_type = #tpu.core_type<tc>, window_params = [{transform_indices = @transform_0, window_bounds = array<i64: 8, 32>}, {pipeline_mode = #tpu.pipeline_mode<synchronous>, transform_indices = @transform_1, window_bounds = array<i64: 8, 32>}, {transform_indices = @transform_2, window_bounds = array<i64: 8, 1>}]} {
    %c0 = arith.constant 0 : index
    %c0_0 = arith.constant 0 : index
    %0 = vector.load %arg1[%c0, %c0_0] : memref<8x32xf32, #tpu.memory_space<vmem>>, vector<8x32xf32>
    %c0_1 = arith.constant 0 : index
    %c0_2 = arith.constant 0 : index
    %1 = vector.load %arg2[%c0_1, %c0_2] : memref<8x32xf32, #tpu.memory_space<vmem>>, vector<8x32xf32>
    %cst = arith.constant dense<0.000000e+00> : vector<8x8xf32>
    %2 = tpu.matmul %0, %1, %cst {dimension_numbers = #tpu.dot_dimension_numbers<[1], [1], [0], [0], [0, 0, 1, 0], [], []>} : vector<8x32xf32>, vector<8x32xf32>, vector<8x8xf32> -> vector<8x8xf32>
    %c8_i32 = arith.constant 8 : i32
    %3 = arith.muli %arg0, %c8_i32 : i32
    %4 = tpu.iota {dimensions = array<i32: 0>} : vector<8x1xi32>
    %5 = vector.broadcast %3 : i32 to vector<8x1xi32>
    %6 = arith.addi %5, %4 : vector<8x1xi32>
    %7 = tpu.iota {dimensions = array<i32: 1>} : vector<1x8xi32>
    %8 = vector.broadcast %6 : vector<8x1xi32> to vector<8x8xi32>
    %9 = vector.broadcast %7 : vector<1x8xi32> to vector<8x8xi32>
    %10 = arith.cmpi eq, %8, %9 : vector<8x8xi32>
    %cst_3 = arith.constant -1.000000e+30 : f32
    %11 = vector.broadcast %cst_3 : f32 to vector<8x8xf32>
    %12 = arith.select %10, %11, %2 : vector<8x8xi1>, vector<8x8xf32>
    %cst_4 = arith.constant dense<0xFF800000> : vector<8xf32>
    %13 = vector.multi_reduction <maximumf>, %12, %cst_4 [1] : vector<8x8xf32> to vector<8xf32>
    %14 = vector.shape_cast %13 : vector<8xf32> to vector<8x1xf32>
    %15 = vector.broadcast %14 : vector<8x1xf32> to vector<8x8xf32>
    %16 = arith.subf %12, %15 : vector<8x8xf32>
    %17 = math.exp %16 : vector<8x8xf32>
    %cst_5 = arith.constant dense<0.000000e+00> : vector<8xf32>
    %18 = vector.multi_reduction <add>, %17, %cst_5 [1] : vector<8x8xf32> to vector<8xf32>
    %19 = vector.shape_cast %18 : vector<8xf32> to vector<8x1xf32>
    %20 = math.log %19 : vector<8x1xf32>
    %21 = arith.addf %14, %20 : vector<8x1xf32>
    %c0_6 = arith.constant 0 : index
    %c0_7 = arith.constant 0 : index
    %22 = vector.load %arg3[%c0_6, %c0_7] : memref<8x1xf32, #tpu.memory_space<vmem>>, vector<8x1xf32>
    tpu.vector_store %arg3[%c0_6, %c0_7], %21 {strides = array<i32>} : memref<8x1xf32, #tpu.memory_space<vmem>>, vector<8x1xf32>,
    return
  }
  func.func @transform_0(%arg0: i32) -> (i32, i32) {
    %c0_i32 = arith.constant 0 : i32
    %c0_i32_0 = arith.constant 0 : i32
    return %arg0, %c0_i32 : i32, i32
  }
  func.func @transform_1(%arg0: i32) -> (i32, i32) {
    %c0_i32 = arith.constant 0 : i32
    %c0_i32_0 = arith.constant 0 : i32
    %c0_i32_1 = arith.constant 0 : i32
    return %c0_i32, %c0_i32_0 : i32, i32
  }
  func.func @transform_2(%arg0: i32) -> (i32, i32) {
    %c0_i32 = arith.constant 0 : i32
    %c0_i32_0 = arith.constant 0 : i32
    return %arg0, %c0_i32 : i32, i32
  }
}

</mosaic_0001>

<llo_original>
// kernel: tpu_custom_call.1
$region0: #{tpu_custom_call.1}
  #allocation0 [shape = 'u32[]', space=smem, size = 0x4, offset = 0x4, fixed_abs, tag = 'smem constant byte address 0x4 - core index']
  #allocation1 [shape = 'u32[72,128]{1,0:T(1,128)}', space=vmem, size = 0x9000, scoped, tag = 'internal scratch']
  %s0 = inlined_call_operand.hbm [shape: f32[8,32], index: 0, kind: input, shape index: {}]
  %s1 = inlined_call_operand.hbm [shape: f32[8,32], index: 1, kind: input, shape index: {}]
  %s2 = inlined_call_operand.vmem [shape: f32[8,1], index: 2, kind: output, shape index: {}]
  %s3 = sld [smem:[#allocation0]]
  $region26: #{tpu_custom_call.1} parent=0
    _
  %s5 = ssub.s32 1, %s3
  %s6 = scalar_select 0, %s5, %s3
  $region1: #{tpu_custom_call.1} parent=0
    #allocation2 [shape = 'u8[4096]{0}', space=vmem, size = 0x1000, scoped, tag = 'input window, operand 0, single buffered']
    #allocation3 [shape = 's32[1]{0}', space=sflag, size = 0x4, scoped, tag = 'scoped memory for tpu_custom_call.1']
    #allocation4 [shape = 'u8[4096]{0}', space=vmem, size = 0x1000, scoped, tag = 'input window, operand 1, single buffered']
    #allocation5 [shape = 's32[1]{0}', space=sflag, size = 0x4, scoped, tag = 'scoped memory for tpu_custom_call.1']
    %7 = vsyncpa [#allocation3], 0
    %8 = vsyncpa [#allocation5], 0
    // Predicated region
    $region2: #{tpu_custom_call.1} parent=1 // pred_check
      _
    $region3: #{tpu_custom_call.1} parent=1 // pred_check_branch
      %10 = sbr.rel (0) target = $region5
    $region4: #{tpu_custom_call.1} parent=1 // pred_region
      %12 = vsyncadd [#allocation3], 0
      %s14 = sshll.u32 %s0, 4
      %s15 = int_to_ptr.hbm [resolvable:$true] %s14
      %s16 = sshll.u32 [#allocation2], 4
      %s17 = int_to_ptr.vmem [resolvable:$true] %s16
      %19 = dma.hbm_to_vmem [thread:$0]  %s15, 128, %s17, [#allocation3]
    $region5: #{tpu_custom_call.1} parent=1 // pred_fallthru
      _
    // Predicated region
    $region6: #{tpu_custom_call.1} parent=1 // pred_check
      _
    $region7: #{tpu_custom_call.1} parent=1 // pred_check_branch
      %21 = sbr.rel (0) target = $region9
    $region8: #{tpu_custom_call.1} parent=1 // pred_region
      %23 = vsyncadd [#allocation5], 0
      %s25 = sshll.u32 %s1, 4
      %s26 = int_to_ptr.hbm [resolvable:$true] %s25
      %s27 = sshll.u32 [#allocation4], 4
      %s28 = int_to_ptr.vmem [resolvable:$true] %s27
      %30 = dma.hbm_to_vmem [thread:$0]  %s26, 128, %s28, [#allocation5]
    $region9: #{tpu_custom_call.1} parent=1 // pred_fallthru
      _
    // Predicated region
    $region10: #{tpu_custom_call.1} parent=1 // pred_check
      _
    $region11: #{tpu_custom_call.1} parent=1 // pred_check_branch
      %32 = sbr.rel (0) target = $region13
    $region12: #{tpu_custom_call.1} parent=1 // pred_region
      %34 = dma.done [#allocation3], 128
    $region13: #{tpu_custom_call.1} parent=1 // pred_fallthru
      _
    // Predicated region
    $region14: #{tpu_custom_call.1} parent=1 // pred_check
      _
    $region15: #{tpu_custom_call.1} parent=1 // pred_check_branch
      %36 = sbr.rel (0) target = $region17
    $region16: #{tpu_custom_call.1} parent=1 // pred_region
      %38 = dma.done [#allocation5], 128
    $region17: #{tpu_custom_call.1} parent=1 // pred_fallthru
      _
    %v39 = vld [vmem:[#allocation2] sm:$0xff]
    %v40 = vld [vmem:[#allocation4] sm:$0xff]
    %vm41 = vcmask 261120
    %v43 = vsel %vm41, %v39, 0
    %v46 = vsel %vm41, %v40, 0
    %48 = vmatpush.xpose.msra.mxu0 0.0
    %49 = vmatpush.xpose.msra.mxu0 0.0
    %50 = vmatpush.xpose.msra.mxu0 0.0
    %51 = vmatpush.xpose.msra.mxu0 0.0
    %52 = vmatpush.xpose.msra.mxu0 0.0
    %53 = vmatpush.xpose.msra.mxu0 0.0
    %54 = vmatpush.xpose.msra.mxu0 0.0
    %55 = vmatpush.xpose.msra.mxu0 0.0
    %56 = vmatpush.xpose.msra.mxu0 0.0
    %57 = vmatpush.xpose.msra.mxu0 0.0
    %58 = vmatpush.xpose.msra.mxu0 0.0
    %59 = vmatpush.xpose.msra.mxu0 0.0
    %60 = vmatpush.xpose.msra.mxu0 0.0
    %61 = vmatpush.xpose.msra.mxu0 0.0
    %62 = vmatpush.xpose.msra.mxu0 0.0
    %63 = vmatpush.xpose.msra.mxu0 %v46
    %64 = vmatmul.f32.gmra.mxu0 %v43
    %v65 = vpop.f32.mrf.mxu0
    %v66 = vadd.f32 0.0, %v65
    %67 = vdwg.mxu0
    %s68 = smul.u32 0, 8
    %v69 = vlaneseq
    %v70 = vshrl.u32 %v69, 7
    %v71 = vstv %s68
    %v72 = vadd.s32 %v71, %v70
    %v73 = vlaneseq
    %v74 = vand.u32 %v73, 127
    %vm75 = vcmp.eq.s32.totalorder %v72, %v74
    %v76 = vsel %vm75, -1e+30, %v66
    %vm77 = vcmask 64512
    %v78 = vsel %vm77, %v76, -inf
    %79 = vmax.xlane.f32.xlu0 %v78
    %v80 = vpop.xlane.xlu0 %79
    %v81 = vsub.f32 %v76, %v80
    %v82 = vmul.f32 %v81, 1.442695
    %v83 = vpow.pop %v82
    %v84 = vsel %vm77, %v83, 0.0
    %85 = vadd.xlane.f32.xlu0 %v84
    %v86 = vpop.xlane.xlu0 %85
    %v87 = vlog2.pop %v86
    %v88 = vmul.f32 %v87, 0.6931472
    %v89 = vadd.f32 %v80, %v88
    %vm90 = vcmask 7168
    %91 = vst.msk [vmem:[%s2] sm:$0xff] %vm90, %v89
    // Predicated region
    $region18: #{tpu_custom_call.1} parent=1 // pred_check
      _
    $region19: #{tpu_custom_call.1} parent=1 // pred_check_branch
      %93 = sbr.rel (0) target = $region21
    $region20: #{tpu_custom_call.1} parent=1 // pred_region
      _
    $region21: #{tpu_custom_call.1} parent=1 // pred_fallthru
      _
    // Predicated region
    $region22: #{tpu_custom_call.1} parent=1 // pred_check
      _
    $region23: #{tpu_custom_call.1} parent=1 // pred_check_branch
      %95 = sbr.rel (0) target = $region25
    $region24: #{tpu_custom_call.1} parent=1 // pred_region
      _
    $region25: #{tpu_custom_call.1} parent=1 // pred_fallthru
      _
    %96 = vsyncpa [#allocation3], 1
    %97 = vsyncpa [#allocation5], 1

</llo_original>
